<compile_context>
chip_gen: v5e
topology: v5e:2x2
jax: 0.10.0
libtpu: 0.0.40
codegen_flags: <defaults>
</compile_context>

<pallas_src>
import jax
import jax.numpy as jnp
from jax.experimental import pallas as pl
from jax.experimental.pallas import tpu as pltpu


def dwconv_kernel(x_ref, top_ref, bot_ref, w_ref, b_ref, o_ref):
    # x_ref  : (TH, W, TC)  row-block of the image (batch & C-block squeezed)
    # top_ref: (W, TC)      image row just above the block (clamped at y=0)
    # bot_ref: (W, TC)      image row just below the block (clamped at y=H-1)
    # w_ref  : (3, 3, TC)   depthwise taps w[ky, kx, c]
    # b_ref  : (1, TC)      bias
    # o_ref  : (TH, W, TC)
    TH, W, _ = x_ref.shape
    r = pl.program_id(2)
    nrow = pl.num_programs(2)
    f32 = jnp.float32

    w = w_ref[...].astype(f32)                    # (3, 3, TC)
    w0, w1, w2 = w[0], w[1], w[2]                 # (3, TC) each, hoisted
    bias = b_ref[0, :].astype(f32)                # (TC,)

    # The out-of-block halo rows hold real neighbour data except at the image
    # border, where their whole weight row is scaled to zero (= zero padding).
    top_scale = (r > 0).astype(f32)
    bot_scale = (r < nrow - 1).astype(f32)

    col = jax.lax.broadcasted_iota(jnp.int32, (W, 1), 0)
    not_first_col = col > 0                       # left tap invalid at x == 0
    not_last_col = col < W - 1                    # right tap invalid at x == W-1

    def conv3(row_t, row_m, row_b, w_t, w_m, w_b):
        # One output row from its three input rows (all (W, TC) f32).
        # Center taps (kx = 1).
        acc = bias + row_t * w_t[1] + row_m * w_m[1] + row_b * w_b[1]
        # Left-neighbour taps (kx = 0): out[x] += in[x-1] * w[:, 0].
        left = (pltpu.roll(row_t, 1, axis=0) * w_t[0]
                + pltpu.roll(row_m, 1, axis=0) * w_m[0]
                + pltpu.roll(row_b, 1, axis=0) * w_b[0])
        acc = acc + jnp.where(not_first_col, left, 0.0)
        # Right-neighbour taps (kx = 2): out[x] += in[x+1] * w[:, 2].
        right = (pltpu.roll(row_t, W - 1, axis=0) * w_t[2]
                 + pltpu.roll(row_m, W - 1, axis=0) * w_m[2]
                 + pltpu.roll(row_b, W - 1, axis=0) * w_b[2])
        acc = acc + jnp.where(not_last_col, right, 0.0)
        return acc

    top_row = top_ref[...].astype(f32)
    bot_row = bot_ref[...].astype(f32)

    if TH == 1:
        o_ref[0] = conv3(top_row, x_ref[0].astype(f32), bot_row,
                         w0 * top_scale, w1, w2 * bot_scale).astype(o_ref.dtype)
    else:
        row0 = x_ref[0].astype(f32)
        row1 = x_ref[1].astype(f32)
        # First row of the block uses the top halo row.
        o_ref[0] = conv3(top_row, row0, row1,
                         w0 * top_scale, w1, w2).astype(o_ref.dtype)

        def body(i, carry):
            prev_row, mid_row = carry
            next_row = x_ref[i + 1].astype(f32)   # each row loaded exactly once
            o_ref[i] = conv3(prev_row, mid_row, next_row,
                             w0, w1, w2).astype(o_ref.dtype)
            return (mid_row, next_row)

        prev_row, mid_row = jax.lax.fori_loop(1, TH - 1, body, (row0, row1),
                                              unroll=True)
        # Last row of the block uses the bottom halo row.
        o_ref[TH - 1] = conv3(prev_row, mid_row, bot_row,
                              w0, w1, w2 * bot_scale).astype(o_ref.dtype)


def dwconv(x, weight, bias, H, W, *, target_block_bytes=4 << 20):
    """Depthwise 3x3 conv matching PyTorch DWConv.forward(x, H, W).

    x      : (B, N, C) with N == H * W   (token layout, channel last)
    weight : (C, 1, 3, 3)                (PyTorch Conv2d groups=C layout)
    bias   : (C,)
    """
    B, N, C = x.shape
    assert N == H * W, "N must equal H*W"

    x4 = x.reshape(B, H, W, C)                               # free reshape
    w_taps = jnp.transpose(weight.reshape(C, 3, 3), (1, 2, 0))  # (3, 3, C)
    b2 = bias.reshape(1, C)

    # --- channel tile: keep channels on the 128-wide lane axis --------------
    TC = 128 if C % 128 == 0 else C
    c_blocks = C // TC

    # --- row tile: divisor of H, modest VMEM footprint, >= ~8 grid steps ----
    itemsize = x.dtype.itemsize
    row_bytes = W * TC * itemsize
    max_rows_by_bytes = max(1, target_block_bytes // max(1, row_bytes))
    want_row_blocks = max(1, min(H, -(-8 // max(1, B * c_blocks))))  # ceil(8/.)
    th_cap = max(1, min(32, max_rows_by_bytes, H // want_row_blocks))
    TH = max(d for d in range(1, th_cap + 1) if H % d == 0)
    r_blocks = H // TH

    # --- VMEM budget: double-buffered in/out blocks + halos + weights -------
    per_step = 2 * TH * row_bytes + 2 * row_bytes + 10 * TC * 4
    vmem_limit = int(min(48 << 20, max(16 << 20, 3 * per_step + (2 << 20))))

    out4 = pl.pallas_call(
        dwconv_kernel,
        out_shape=jax.ShapeDtypeStruct((B, H, W, C), x.dtype),
        grid_spec=pltpu.PrefetchScalarGridSpec(
            num_scalar_prefetch=0,
            grid=(B, c_blocks, r_blocks),
            in_specs=[
                # main row-block of the image
                pl.BlockSpec((None, TH, W, TC), lambda b, c, r: (b, r, 0, c)),
                # 1-row halo above the block (clamped at the top border;
                # its weight row is zeroed in-kernel when r == 0)
                pl.BlockSpec((None, None, W, TC),
                             lambda b, c, r: (b, jnp.maximum(r * TH - 1, 0), 0, c)),
                # 1-row halo below the block (clamped at the bottom border)
                pl.BlockSpec((None, None, W, TC),
                             lambda b, c, r: (b, jnp.minimum(r * TH + TH, H - 1), 0, c)),
                # depthwise taps and bias, blocked along C only
                pl.BlockSpec((3, 3, TC), lambda b, c, r: (0, 0, c)),
                pl.BlockSpec((1, TC), lambda b, c, r: (0, c)),
            ],
            out_specs=pl.BlockSpec((None, TH, W, TC), lambda b, c, r: (b, r, 0, c)),
        ),
        compiler_params=pltpu.CompilerParams(
            dimension_semantics=("parallel", "parallel", "parallel"),
            vmem_limit_bytes=vmem_limit),
    )(x4, x4, x4, w_taps, b2)
    return out4.reshape(B, N, C)


def dwconv_ref(x, weight, bias, H, W):
    """Pure-JAX reference of the PyTorch DWConv forward."""
    B, N, C = x.shape
    xi = jnp.transpose(x, (0, 2, 1)).reshape(B, C, H, W)
    y = jax.lax.conv_general_dilated(
        xi, weight,
        window_strides=(1, 1), padding=((1, 1), (1, 1)),
        dimension_numbers=("NCHW", "OIHW", "NCHW"),
        feature_group_count=C,
        precision=jax.lax.Precision.HIGHEST)
    y = y + bias[None, :, None, None]
    return jnp.transpose(y.reshape(B, C, N), (0, 2, 1))


if __name__ == "__main__":
    # Small but lane-dense config (module default is C=768; C=128 keeps the
    # demo tiny while staying a multiple of the 128-lane vreg width).
    B, C, H, W = 2, 128, 16, 16
    N = H * W

    key = jax.random.PRNGKey(0)
    kx, kw, kb = jax.random.split(key, 3)
    x = jax.random.normal(kx, (B, N, C), dtype=jnp.float32)
    weight = jax.random.normal(kw, (C, 1, 3, 3), dtype=jnp.float32) * 0.1
    bias = jax.random.normal(kb, (C,), dtype=jnp.float32) * 0.1

    out = jax.block_until_ready(dwconv(x, weight, bias, H, W))
    ref = dwconv_ref(x, weight, bias, H, W)
    assert out.shape == (B, N, C)
    assert jnp.allclose(out, ref, atol=1e-5, rtol=1e-5), "mismatch vs reference"

    print("KERNEL_OK")
</pallas_src>

<mosaic_0001>
module attributes {stable_mosaic.version = 11 : i64} {
  func.func @dwconv_kernel(%arg0: i32, %arg1: i32, %arg2: i32, %arg3: memref<1x4x16x128xf32, #tpu.memory_space<vmem>>, %arg4: memref<1x1x16x128xf32, #tpu.memory_space<vmem>>, %arg5: memref<1x1x16x128xf32, #tpu.memory_space<vmem>>, %arg6: memref<3x3x128xf32, #tpu.memory_space<vmem>>, %arg7: memref<1x128xf32, #tpu.memory_space<vmem>>, %arg8: memref<1x4x16x128xf32, #tpu.memory_space<vmem>>) attributes {dimension_semantics = [#tpu.dimension_semantics<parallel>, #tpu.dimension_semantics<parallel>, #tpu.dimension_semantics<parallel>], iteration_bounds = array<i64: 2, 1, 4>, scalar_prefetch = 0 : i64, scratch_operands = 0 : i64, tpu.core_type = #tpu.core_type<tc>, window_params = [{transform_indices = @transform_0, window_bounds = array<i64: 1, 4, 16, 128>}, {transform_indices = @transform_1, window_bounds = array<i64: 1, 1, 16, 128>}, {transform_indices = @transform_2, window_bounds = array<i64: 1, 1, 16, 128>}, {transform_indices = @transform_3, window_bounds = array<i64: 3, 3, 128>}, {transform_indices = @transform_4, window_bounds = array<i64: 1, 128>}, {transform_indices = @transform_5, window_bounds = array<i64: 1, 4, 16, 128>}]} {
    %c0 = arith.constant 0 : index
    %c0_0 = arith.constant 0 : index
    %c0_1 = arith.constant 0 : index
    %0 = vector.load %arg6[%c0, %c0_0, %c0_1] : memref<3x3x128xf32, #tpu.memory_space<vmem>>, vector<3x3x128xf32>
    %1 = vector.extract_strided_slice %0 {offsets = [0, 0, 0], sizes = [1, 3, 128], strides = [1, 1, 1]} : vector<3x3x128xf32> to vector<1x3x128xf32>
    %2 = vector.shape_cast %1 : vector<1x3x128xf32> to vector<3x128xf32>
    %3 = vector.extract_strided_slice %0 {offsets = [1, 0, 0], sizes = [1, 3, 128], strides = [1, 1, 1]} : vector<3x3x128xf32> to vector<1x3x128xf32>
    %4 = vector.shape_cast %3 : vector<1x3x128xf32> to vector<3x128xf32>
    %5 = vector.extract_strided_slice %0 {offsets = [2, 0, 0], sizes = [1, 3, 128], strides = [1, 1, 1]} : vector<3x3x128xf32> to vector<1x3x128xf32>
    %6 = vector.shape_cast %5 : vector<1x3x128xf32> to vector<3x128xf32>
    %c0_2 = arith.constant 0 : index
    %c0_3 = arith.constant 0 : index
    %7 = vector.load %arg7[%c0_2, %c0_3] : memref<1x128xf32, #tpu.memory_space<vmem>>, vector<1x128xf32>
    %8 = vector.shape_cast %7 : vector<1x128xf32> to vector<128xf32>
    %c0_i32 = arith.constant 0 : i32
    %9 = arith.cmpi sgt, %arg2, %c0_i32 : i32
    %10 = arith.extui %9 : i1 to i32
    %11 = arith.sitofp %10 : i32 to f32
    %c3_i32 = arith.constant 3 : i32
    %12 = arith.cmpi slt, %arg2, %c3_i32 : i32
    %13 = arith.extui %12 : i1 to i32
    %14 = arith.sitofp %13 : i32 to f32
    %15 = tpu.iota {dimensions = array<i32: 0>} : vector<16x1xi32>
    %c0_i32_4 = arith.constant 0 : i32
    %16 = vector.broadcast %c0_i32_4 : i32 to vector<16x1xi32>
    %17 = arith.cmpi sgt, %15, %16 : vector<16x1xi32>
    %c15_i32 = arith.constant 15 : i32
    %18 = vector.broadcast %c15_i32 : i32 to vector<16x1xi32>
    %19 = arith.cmpi slt, %15, %18 : vector<16x1xi32>
    %c0_5 = arith.constant 0 : index
    %c0_6 = arith.constant 0 : index
    %c0_7 = arith.constant 0 : index
    %c0_8 = arith.constant 0 : index
    %20 = vector.load %arg4[%c0_5, %c0_6, %c0_7, %c0_8] : memref<1x1x16x128xf32, #tpu.memory_space<vmem>>, vector<1x1x16x128xf32>
    %21 = vector.shape_cast %20 : vector<1x1x16x128xf32> to vector<16x128xf32>
    %c0_9 = arith.constant 0 : index
    %c0_10 = arith.constant 0 : index
    %c0_11 = arith.constant 0 : index
    %c0_12 = arith.constant 0 : index
    %22 = vector.load %arg5[%c0_9, %c0_10, %c0_11, %c0_12] : memref<1x1x16x128xf32, #tpu.memory_space<vmem>>, vector<1x1x16x128xf32>
    %23 = vector.shape_cast %22 : vector<1x1x16x128xf32> to vector<16x128xf32>
    %c0_13 = arith.constant 0 : index
    %c0_14 = arith.constant 0 : index
    %c0_15 = arith.constant 0 : index
    %c0_16 = arith.constant 0 : index
    %24 = vector.load %arg3[%c0_13, %c0_14, %c0_15, %c0_16] : memref<1x4x16x128xf32, #tpu.memory_space<vmem>>, vector<1x1x16x128xf32>
    %25 = vector.shape_cast %24 : vector<1x1x16x128xf32> to vector<16x128xf32>
    %c0_17 = arith.constant 0 : index
    %c1 = arith.constant 1 : index
    %c0_18 = arith.constant 0 : index
    %c0_19 = arith.constant 0 : index
    %26 = vector.load %arg3[%c0_17, %c1, %c0_18, %c0_19] : memref<1x4x16x128xf32, #tpu.memory_space<vmem>>, vector<1x1x16x128xf32>
    %27 = vector.shape_cast %26 : vector<1x1x16x128xf32> to vector<16x128xf32>
    %28 = vector.broadcast %11 : f32 to vector<3x128xf32>
    %29 = arith.mulf %2, %28 : vector<3x128xf32>
    %30 = vector.extract_strided_slice %29 {offsets = [1, 0], sizes = [1, 128], strides = [1, 1]} : vector<3x128xf32> to vector<1x128xf32>
    %31 = vector.shape_cast %30 : vector<1x128xf32> to vector<128xf32>
    %32 = vector.shape_cast %31 : vector<128xf32> to vector<1x128xf32>
    %33 = vector.broadcast %32 : vector<1x128xf32> to vector<16x128xf32>
    %34 = arith.mulf %21, %33 : vector<16x128xf32>
    %35 = vector.shape_cast %8 : vector<128xf32> to vector<1x128xf32>
    %36 = vector.broadcast %35 : vector<1x128xf32> to vector<16x128xf32>
    %37 = arith.addf %36, %34 : vector<16x128xf32>
    %38 = vector.extract_strided_slice %4 {offsets = [1, 0], sizes = [1, 128], strides = [1, 1]} : vector<3x128xf32> to vector<1x128xf32>
    %39 = vector.shape_cast %38 : vector<1x128xf32> to vector<128xf32>
    %40 = vector.shape_cast %39 : vector<128xf32> to vector<1x128xf32>
    %41 = vector.broadcast %40 : vector<1x128xf32> to vector<16x128xf32>
    %42 = arith.mulf %25, %41 : vector<16x128xf32>
    %43 = arith.addf %37, %42 : vector<16x128xf32>
    %44 = vector.extract_strided_slice %6 {offsets = [1, 0], sizes = [1, 128], strides = [1, 1]} : vector<3x128xf32> to vector<1x128xf32>
    %45 = vector.shape_cast %44 : vector<1x128xf32> to vector<128xf32>
    %46 = vector.shape_cast %45 : vector<128xf32> to vector<1x128xf32>
    %47 = vector.broadcast %46 : vector<1x128xf32> to vector<16x128xf32>
    %48 = arith.mulf %27, %47 : vector<16x128xf32>
    %49 = arith.addf %43, %48 : vector<16x128xf32>
    %c1_i32 = arith.constant 1 : i32
    %50 = tpu.dynamic_rotate %21 by %c1_i32 dim 0 : vector<16x128xf32>, i32 -> vector<16x128xf32>
    %51 = vector.extract_strided_slice %29 {offsets = [0, 0], sizes = [1, 128], strides = [1, 1]} : vector<3x128xf32> to vector<1x128xf32>
    %52 = vector.shape_cast %51 : vector<1x128xf32> to vector<128xf32>
    %53 = vector.shape_cast %52 : vector<128xf32> to vector<1x128xf32>
    %54 = vector.broadcast %53 : vector<1x128xf32> to vector<16x128xf32>
    %55 = arith.mulf %50, %54 : vector<16x128xf32>
    %c1_i32_20 = arith.constant 1 : i32
    %56 = tpu.dynamic_rotate %25 by %c1_i32_20 dim 0 : vector<16x128xf32>, i32 -> vector<16x128xf32>
    %57 = vector.extract_strided_slice %4 {offsets = [0, 0], sizes = [1, 128], strides = [1, 1]} : vector<3x128xf32> to vector<1x128xf32>
    %58 = vector.shape_cast %57 : vector<1x128xf32> to vector<128xf32>
    %59 = vector.shape_cast %58 : vector<128xf32> to vector<1x128xf32>
    %60 = vector.broadcast %59 : vector<1x128xf32> to vector<16x128xf32>
    %61 = arith.mulf %56, %60 : vector<16x128xf32>
    %62 = arith.addf %55, %61 : vector<16x128xf32>
    %c1_i32_21 = arith.constant 1 : i32
    %63 = tpu.dynamic_rotate %27 by %c1_i32_21 dim 0 : vector<16x128xf32>, i32 -> vector<16x128xf32>
    %64 = vector.extract_strided_slice %6 {offsets = [0, 0], sizes = [1, 128], strides = [1, 1]} : vector<3x128xf32> to vector<1x128xf32>
    %65 = vector.shape_cast %64 : vector<1x128xf32> to vector<128xf32>
    %66 = vector.shape_cast %65 : vector<128xf32> to vector<1x128xf32>
    %67 = vector.broadcast %66 : vector<1x128xf32> to vector<16x128xf32>
    %68 = arith.mulf %63, %67 : vector<16x128xf32>
    %69 = arith.addf %62, %68 : vector<16x128xf32>
    %cst = arith.constant 0.000000e+00 : f32
    %70 = vector.shape_cast %17 : vector<16x1xi1> to vector<16x1xi1>
    %71 = vector.broadcast %70 : vector<16x1xi1> to vector<16x128xi1>
    %72 = vector.broadcast %cst : f32 to vector<16x128xf32>
    %73 = arith.select %71, %69, %72 : vector<16x128xi1>, vector<16x128xf32>
    %74 = arith.addf %49, %73 : vector<16x128xf32>
    %c15_i32_22 = arith.constant 15 : i32
    %75 = tpu.dynamic_rotate %21 by %c15_i32_22 dim 0 : vector<16x128xf32>, i32 -> vector<16x128xf32>
    %76 = vector.extract_strided_slice %29 {offsets = [2, 0], sizes = [1, 128], strides = [1, 1]} : vector<3x128xf32> to vector<1x128xf32>
    %77 = vector.shape_cast %76 : vector<1x128xf32> to vector<128xf32>
    %78 = vector.shape_cast %77 : vector<128xf32> to vector<1x128xf32>
    %79 = vector.broadcast %78 : vector<1x128xf32> to vector<16x128xf32>
    %80 = arith.mulf %75, %79 : vector<16x128xf32>
    %c15_i32_23 = arith.constant 15 : i32
    %81 = tpu.dynamic_rotate %25 by %c15_i32_23 dim 0 : vector<16x128xf32>, i32 -> vector<16x128xf32>
    %82 = vector.extract_strided_slice %4 {offsets = [2, 0], sizes = [1, 128], strides = [1, 1]} : vector<3x128xf32> to vector<1x128xf32>
    %83 = vector.shape_cast %82 : vector<1x128xf32> to vector<128xf32>
    %84 = vector.shape_cast %83 : vector<128xf32> to vector<1x128xf32>
    %85 = vector.broadcast %84 : vector<1x128xf32> to vector<16x128xf32>
    %86 = arith.mulf %81, %85 : vector<16x128xf32>
    %87 = arith.addf %80, %86 : vector<16x128xf32>
    %c15_i32_24 = arith.constant 15 : i32
    %88 = tpu.dynamic_rotate %27 by %c15_i32_24 dim 0 : vector<16x128xf32>, i32 -> vector<16x128xf32>
    %89 = vector.extract_strided_slice %6 {offsets = [2, 0], sizes = [1, 128], strides = [1, 1]} : vector<3x128xf32> to vector<1x128xf32>
    %90 = vector.shape_cast %89 : vector<1x128xf32> to vector<128xf32>
    %91 = vector.shape_cast %90 : vector<128xf32> to vector<1x128xf32>
    %92 = vector.broadcast %91 : vector<1x128xf32> to vector<16x128xf32>
    %93 = arith.mulf %88, %92 : vector<16x128xf32>
    %94 = arith.addf %87, %93 : vector<16x128xf32>
    %cst_25 = arith.constant 0.000000e+00 : f32
    %95 = vector.shape_cast %19 : vector<16x1xi1> to vector<16x1xi1>
    %96 = vector.broadcast %95 : vector<16x1xi1> to vector<16x128xi1>
    %97 = vector.broadcast %cst_25 : f32 to vector<16x128xf32>
    %98 = arith.select %96, %94, %97 : vector<16x128xi1>, vector<16x128xf32>
    %99 = arith.addf %74, %98 : vector<16x128xf32>
    %c0_26 = arith.constant 0 : index
    %c0_27 = arith.constant 0 : index
    %c0_28 = arith.constant 0 : index
    %c0_29 = arith.constant 0 : index
    %100 = vector.load %arg8[%c0_26, %c0_27, %c0_28, %c0_29] : memref<1x4x16x128xf32, #tpu.memory_space<vmem>>, vector<1x1x16x128xf32>
    %101 = vector.shape_cast %100 : vector<1x1x16x128xf32> to vector<16x128xf32>
    %102 = vector.shape_cast %99 : vector<16x128xf32> to vector<1x1x16x128xf32>
    tpu.vector_store %arg8[%c0_26, %c0_27, %c0_28, %c0_29], %102 {strides = array<i32>} : memref<1x4x16x128xf32, #tpu.memory_space<vmem>>, vector<1x1x16x128xf32>,
    %c1_i32_30 = arith.constant 1 : i32
    %c1_i32_31 = arith.constant 1 : i32
    %103 = arith.addi %c1_i32_30, %c1_i32_31 : i32
    %c0_32 = arith.constant 0 : index
    %104 = arith.index_cast %103 : i32 to index
    %c0_33 = arith.constant 0 : index
    %c0_34 = arith.constant 0 : index
    %105 = vector.load %arg3[%c0_32, %104, %c0_33, %c0_34] : memref<1x4x16x128xf32, #tpu.memory_space<vmem>>, vector<1x1x16x128xf32>
    %106 = vector.shape_cast %105 : vector<1x1x16x128xf32> to vector<16x128xf32>
    %107 = vector.extract_strided_slice %2 {offsets = [1, 0], sizes = [1, 128], strides = [1, 1]} : vector<3x128xf32> to vector<1x128xf32>
    %108 = vector.shape_cast %107 : vector<1x128xf32> to vector<128xf32>
    %109 = vector.shape_cast %108 : vector<128xf32> to vector<1x128xf32>
    %110 = vector.broadcast %109 : vector<1x128xf32> to vector<16x128xf32>
    %111 = arith.mulf %25, %110 : vector<16x128xf32>
    %112 = vector.shape_cast %8 : vector<128xf32> to vector<1x128xf32>
    %113 = vector.broadcast %112 : vector<1x128xf32> to vector<16x128xf32>
    %114 = arith.addf %113, %111 : vector<16x128xf32>
    %115 = vector.extract_strided_slice %4 {offsets = [1, 0], sizes = [1, 128], strides = [1, 1]} : vector<3x128xf32> to vector<1x128xf32>
    %116 = vector.shape_cast %115 : vector<1x128xf32> to vector<128xf32>
    %117 = vector.shape_cast %116 : vector<128xf32> to vector<1x128xf32>
    %118 = vector.broadcast %117 : vector<1x128xf32> to vector<16x128xf32>
    %119 = arith.mulf %27, %118 : vector<16x128xf32>
    %120 = arith.addf %114, %119 : vector<16x128xf32>
    %121 = vector.extract_strided_slice %6 {offsets = [1, 0], sizes = [1, 128], strides = [1, 1]} : vector<3x128xf32> to vector<1x128xf32>
    %122 = vector.shape_cast %121 : vector<1x128xf32> to vector<128xf32>
    %123 = vector.shape_cast %122 : vector<128xf32> to vector<1x128xf32>
    %124 = vector.broadcast %123 : vector<1x128xf32> to vector<16x128xf32>
    %125 = arith.mulf %106, %124 : vector<16x128xf32>
    %126 = arith.addf %120, %125 : vector<16x128xf32>
    %c1_i32_35 = arith.constant 1 : i32
    %127 = tpu.dynamic_rotate %25 by %c1_i32_35 dim 0 : vector<16x128xf32>, i32 -> vector<16x128xf32>
    %128 = vector.extract_strided_slice %2 {offsets = [0, 0], sizes = [1, 128], strides = [1, 1]} : vector<3x128xf32> to vector<1x128xf32>
    %129 = vector.shape_cast %128 : vector<1x128xf32> to vector<128xf32>
    %130 = vector.shape_cast %129 : vector<128xf32> to vector<1x128xf32>
    %131 = vector.broadcast %130 : vector<1x128xf32> to vector<16x128xf32>
    %132 = arith.mulf %127, %131 : vector<16x128xf32>
    %c1_i32_36 = arith.constant 1 : i32
    %133 = tpu.dynamic_rotate %27 by %c1_i32_36 dim 0 : vector<16x128xf32>, i32 -> vector<16x128xf32>
    %134 = vector.extract_strided_slice %4 {offsets = [0, 0], sizes = [1, 128], strides = [1, 1]} : vector<3x128xf32> to vector<1x128xf32>
    %135 = vector.shape_cast %134 : vector<1x128xf32> to vector<128xf32>
    %136 = vector.shape_cast %135 : vector<128xf32> to vector<1x128xf32>
    %137 = vector.broadcast %136 : vector<1x128xf32> to vector<16x128xf32>
    %138 = arith.mulf %133, %137 : vector<16x128xf32>
    %139 = arith.addf %132, %138 : vector<16x128xf32>
    %c1_i32_37 = arith.constant 1 : i32
    %140 = tpu.dynamic_rotate %106 by %c1_i32_37 dim 0 : vector<16x128xf32>, i32 -> vector<16x128xf32>
    %141 = vector.extract_strided_slice %6 {offsets = [0, 0], sizes = [1, 128], strides = [1, 1]} : vector<3x128xf32> to vector<1x128xf32>
    %142 = vector.shape_cast %141 : vector<1x128xf32> to vector<128xf32>
    %143 = vector.shape_cast %142 : vector<128xf32> to vector<1x128xf32>
    %144 = vector.broadcast %143 : vector<1x128xf32> to vector<16x128xf32>
    %145 = arith.mulf %140, %144 : vector<16x128xf32>
    %146 = arith.addf %139, %145 : vector<16x128xf32>
    %cst_38 = arith.constant 0.000000e+00 : f32
    %147 = vector.shape_cast %17 : vector<16x1xi1> to vector<16x1xi1>
    %148 = vector.broadcast %147 : vector<16x1xi1> to vector<16x128xi1>
    %149 = vector.broadcast %cst_38 : f32 to vector<16x128xf32>
    %150 = arith.select %148, %146, %149 : vector<16x128xi1>, vector<16x128xf32>
    %151 = arith.addf %126, %150 : vector<16x128xf32>
    %c15_i32_39 = arith.constant 15 : i32
    %152 = tpu.dynamic_rotate %25 by %c15_i32_39 dim 0 : vector<16x128xf32>, i32 -> vector<16x128xf32>
    %153 = vector.extract_strided_slice %2 {offsets = [2, 0], sizes = [1, 128], strides = [1, 1]} : vector<3x128xf32> to vector<1x128xf32>
    %154 = vector.shape_cast %153 : vector<1x128xf32> to vector<128xf32>
    %155 = vector.shape_cast %154 : vector<128xf32> to vector<1x128xf32>
    %156 = vector.broadcast %155 : vector<1x128xf32> to vector<16x128xf32>
    %157 = arith.mulf %152, %156 : vector<16x128xf32>
    %c15_i32_40 = arith.constant 15 : i32
    %158 = tpu.dynamic_rotate %27 by %c15_i32_40 dim 0 : vector<16x128xf32>, i32 -> vector<16x128xf32>
    %159 = vector.extract_strided_slice %4 {offsets = [2, 0], sizes = [1, 128], strides = [1, 1]} : vector<3x128xf32> to vector<1x128xf32>
    %160 = vector.shape_cast %159 : vector<1x128xf32> to vector<128xf32>
    %161 = vector.shape_cast %160 : vector<128xf32> to vector<1x128xf32>
    %162 = vector.broadcast %161 : vector<1x128xf32> to vector<16x128xf32>
    %163 = arith.mulf %158, %162 : vector<16x128xf32>
    %164 = arith.addf %157, %163 : vector<16x128xf32>
    %c15_i32_41 = arith.constant 15 : i32
    %165 = tpu.dynamic_rotate %106 by %c15_i32_41 dim 0 : vector<16x128xf32>, i32 -> vector<16x128xf32>
    %166 = vector.extract_strided_slice %6 {offsets = [2, 0], sizes = [1, 128], strides = [1, 1]} : vector<3x128xf32> to vector<1x128xf32>
    %167 = vector.shape_cast %166 : vector<1x128xf32> to vector<128xf32>
    %168 = vector.shape_cast %167 : vector<128xf32> to vector<1x128xf32>
    %169 = vector.broadcast %168 : vector<1x128xf32> to vector<16x128xf32>
    %170 = arith.mulf %165, %169 : vector<16x128xf32>
    %171 = arith.addf %164, %170 : vector<16x128xf32>
    %cst_42 = arith.constant 0.000000e+00 : f32
    %172 = vector.shape_cast %19 : vector<16x1xi1> to vector<16x1xi1>
    %173 = vector.broadcast %172 : vector<16x1xi1> to vector<16x128xi1>
    %174 = vector.broadcast %cst_42 : f32 to vector<16x128xf32>
    %175 = arith.select %173, %171, %174 : vector<16x128xi1>, vector<16x128xf32>
    %176 = arith.addf %151, %175 : vector<16x128xf32>
    %c0_43 = arith.constant 0 : index
    %177 = arith.index_cast %c1_i32_30 : i32 to index
    %c0_44 = arith.constant 0 : index
    %c0_45 = arith.constant 0 : index
    %178 = vector.load %arg8[%c0_43, %177, %c0_44, %c0_45] : memref<1x4x16x128xf32, #tpu.memory_space<vmem>>, vector<1x1x16x128xf32>
    %179 = vector.shape_cast %178 : vector<1x1x16x128xf32> to vector<16x128xf32>
    %180 = vector.shape_cast %176 : vector<16x128xf32> to vector<1x1x16x128xf32>
    tpu.vector_store %arg8[%c0_43, %177, %c0_44, %c0_45], %180 {strides = array<i32>} : memref<1x4x16x128xf32, #tpu.memory_space<vmem>>, vector<1x1x16x128xf32>,
    %c2_i32 = arith.constant 2 : i32
    %c1_i32_46 = arith.constant 1 : i32
    %181 = arith.addi %c2_i32, %c1_i32_46 : i32
    %c0_47 = arith.constant 0 : index
    %182 = arith.index_cast %181 : i32 to index
    %c0_48 = arith.constant 0 : index
    %c0_49 = arith.constant 0 : index
    %183 = vector.load %arg3[%c0_47, %182, %c0_48, %c0_49] : memref<1x4x16x128xf32, #tpu.memory_space<vmem>>, vector<1x1x16x128xf32>
    %184 = vector.shape_cast %183 : vector<1x1x16x128xf32> to vector<16x128xf32>
    %185 = vector.extract_strided_slice %2 {offsets = [1, 0], sizes = [1, 128], strides = [1, 1]} : vector<3x128xf32> to vector<1x128xf32>
    %186 = vector.shape_cast %185 : vector<1x128xf32> to vector<128xf32>
    %187 = vector.shape_cast %186 : vector<128xf32> to vector<1x128xf32>
    %188 = vector.broadcast %187 : vector<1x128xf32> to vector<16x128xf32>
    %189 = arith.mulf %27, %188 : vector<16x128xf32>
    %190 = vector.shape_cast %8 : vector<128xf32> to vector<1x128xf32>
    %191 = vector.broadcast %190 : vector<1x128xf32> to vector<16x128xf32>
    %192 = arith.addf %191, %189 : vector<16x128xf32>
    %193 = vector.extract_strided_slice %4 {offsets = [1, 0], sizes = [1, 128], strides = [1, 1]} : vector<3x128xf32> to vector<1x128xf32>
    %194 = vector.shape_cast %193 : vector<1x128xf32> to vector<128xf32>
    %195 = vector.shape_cast %194 : vector<128xf32> to vector<1x128xf32>
    %196 = vector.broadcast %195 : vector<1x128xf32> to vector<16x128xf32>
    %197 = arith.mulf %106, %196 : vector<16x128xf32>
    %198 = arith.addf %192, %197 : vector<16x128xf32>
    %199 = vector.extract_strided_slice %6 {offsets = [1, 0], sizes = [1, 128], strides = [1, 1]} : vector<3x128xf32> to vector<1x128xf32>
    %200 = vector.shape_cast %199 : vector<1x128xf32> to vector<128xf32>
    %201 = vector.shape_cast %200 : vector<128xf32> to vector<1x128xf32>
    %202 = vector.broadcast %201 : vector<1x128xf32> to vector<16x128xf32>
    %203 = arith.mulf %184, %202 : vector<16x128xf32>
    %204 = arith.addf %198, %203 : vector<16x128xf32>
    %c1_i32_50 = arith.constant 1 : i32
    %205 = tpu.dynamic_rotate %27 by %c1_i32_50 dim 0 : vector<16x128xf32>, i32 -> vector<16x128xf32>
    %206 = vector.extract_strided_slice %2 {offsets = [0, 0], sizes = [1, 128], strides = [1, 1]} : vector<3x128xf32> to vector<1x128xf32>
    %207 = vector.shape_cast %206 : vector<1x128xf32> to vector<128xf32>
    %208 = vector.shape_cast %207 : vector<128xf32> to vector<1x128xf32>
    %209 = vector.broadcast %208 : vector<1x128xf32> to vector<16x128xf32>
    %210 = arith.mulf %205, %209 : vector<16x128xf32>
    %c1_i32_51 = arith.constant 1 : i32
    %211 = tpu.dynamic_rotate %106 by %c1_i32_51 dim 0 : vector<16x128xf32>, i32 -> vector<16x128xf32>
    %212 = vector.extract_strided_slice %4 {offsets = [0, 0], sizes = [1, 128], strides = [1, 1]} : vector<3x128xf32> to vector<1x128xf32>
    %213 = vector.shape_cast %212 : vector<1x128xf32> to vector<128xf32>
    %214 = vector.shape_cast %213 : vector<128xf32> to vector<1x128xf32>
    %215 = vector.broadcast %214 : vector<1x128xf32> to vector<16x128xf32>
    %216 = arith.mulf %211, %215 : vector<16x128xf32>
    %217 = arith.addf %210, %216 : vector<16x128xf32>
    %c1_i32_52 = arith.constant 1 : i32
    %218 = tpu.dynamic_rotate %184 by %c1_i32_52 dim 0 : vector<16x128xf32>, i32 -> vector<16x128xf32>
    %219 = vector.extract_strided_slice %6 {offsets = [0, 0], sizes = [1, 128], strides = [1, 1]} : vector<3x128xf32> to vector<1x128xf32>
    %220 = vector.shape_cast %219 : vector<1x128xf32> to vector<128xf32>
    %221 = vector.shape_cast %220 : vector<128xf32> to vector<1x128xf32>
    %222 = vector.broadcast %221 : vector<1x128xf32> to vector<16x128xf32>
    %223 = arith.mulf %218, %222 : vector<16x128xf32>
    %224 = arith.addf %217, %223 : vector<16x128xf32>
    %cst_53 = arith.constant 0.000000e+00 : f32
    %225 = vector.shape_cast %17 : vector<16x1xi1> to vector<16x1xi1>
    %226 = vector.broadcast %225 : vector<16x1xi1> to vector<16x128xi1>
    %227 = vector.broadcast %cst_53 : f32 to vector<16x128xf32>
    %228 = arith.select %226, %224, %227 : vector<16x128xi1>, vector<16x128xf32>
    %229 = arith.addf %204, %228 : vector<16x128xf32>
    %c15_i32_54 = arith.constant 15 : i32
    %230 = tpu.dynamic_rotate %27 by %c15_i32_54 dim 0 : vector<16x128xf32>, i32 -> vector<16x128xf32>
    %231 = vector.extract_strided_slice %2 {offsets = [2, 0], sizes = [1, 128], strides = [1, 1]} : vector<3x128xf32> to vector<1x128xf32>
    %232 = vector.shape_cast %231 : vector<1x128xf32> to vector<128xf32>
    %233 = vector.shape_cast %232 : vector<128xf32> to vector<1x128xf32>
    %234 = vector.broadcast %233 : vector<1x128xf32> to vector<16x128xf32>
    %235 = arith.mulf %230, %234 : vector<16x128xf32>
    %c15_i32_55 = arith.constant 15 : i32
    %236 = tpu.dynamic_rotate %106 by %c15_i32_55 dim 0 : vector<16x128xf32>, i32 -> vector<16x128xf32>
    %237 = vector.extract_strided_slice %4 {offsets = [2, 0], sizes = [1, 128], strides = [1, 1]} : vector<3x128xf32> to vector<1x128xf32>
    %238 = vector.shape_cast %237 : vector<1x128xf32> to vector<128xf32>
    %239 = vector.shape_cast %238 : vector<128xf32> to vector<1x128xf32>
    %240 = vector.broadcast %239 : vector<1x128xf32> to vector<16x128xf32>
    %241 = arith.mulf %236, %240 : vector<16x128xf32>
    %242 = arith.addf %235, %241 : vector<16x128xf32>
    %c15_i32_56 = arith.constant 15 : i32
    %243 = tpu.dynamic_rotate %184 by %c15_i32_56 dim 0 : vector<16x128xf32>, i32 -> vector<16x128xf32>
    %244 = vector.extract_strided_slice %6 {offsets = [2, 0], sizes = [1, 128], strides = [1, 1]} : vector<3x128xf32> to vector<1x128xf32>
    %245 = vector.shape_cast %244 : vector<1x128xf32> to vector<128xf32>
    %246 = vector.shape_cast %245 : vector<128xf32> to vector<1x128xf32>
    %247 = vector.broadcast %246 : vector<1x128xf32> to vector<16x128xf32>
    %248 = arith.mulf %243, %247 : vector<16x128xf32>
    %249 = arith.addf %242, %248 : vector<16x128xf32>
    %cst_57 = arith.constant 0.000000e+00 : f32
    %250 = vector.shape_cast %19 : vector<16x1xi1> to vector<16x1xi1>
    %251 = vector.broadcast %250 : vector<16x1xi1> to vector<16x128xi1>
    %252 = vector.broadcast %cst_57 : f32 to vector<16x128xf32>
    %253 = arith.select %251, %249, %252 : vector<16x128xi1>, vector<16x128xf32>
    %254 = arith.addf %229, %253 : vector<16x128xf32>
    %c0_58 = arith.constant 0 : index
    %255 = arith.index_cast %c2_i32 : i32 to index
    %c0_59 = arith.constant 0 : index
    %c0_60 = arith.constant 0 : index
    %256 = vector.load %arg8[%c0_58, %255, %c0_59, %c0_60] : memref<1x4x16x128xf32, #tpu.memory_space<vmem>>, vector<1x1x16x128xf32>
    %257 = vector.shape_cast %256 : vector<1x1x16x128xf32> to vector<16x128xf32>
    %258 = vector.shape_cast %254 : vector<16x128xf32> to vector<1x1x16x128xf32>
    tpu.vector_store %arg8[%c0_58, %255, %c0_59, %c0_60], %258 {strides = array<i32>} : memref<1x4x16x128xf32, #tpu.memory_space<vmem>>, vector<1x1x16x128xf32>,
    %c2_i32_61 = arith.constant 2 : i32
    %259 = vector.broadcast %14 : f32 to vector<3x128xf32>
    %260 = arith.mulf %6, %259 : vector<3x128xf32>
    %261 = vector.extract_strided_slice %2 {offsets = [1, 0], sizes = [1, 128], strides = [1, 1]} : vector<3x128xf32> to vector<1x128xf32>
    %262 = vector.shape_cast %261 : vector<1x128xf32> to vector<128xf32>
    %263 = vector.shape_cast %262 : vector<128xf32> to vector<1x128xf32>
    %264 = vector.broadcast %263 : vector<1x128xf32> to vector<16x128xf32>
    %265 = arith.mulf %106, %264 : vector<16x128xf32>
    %266 = vector.shape_cast %8 : vector<128xf32> to vector<1x128xf32>
    %267 = vector.broadcast %266 : vector<1x128xf32> to vector<16x128xf32>
    %268 = arith.addf %267, %265 : vector<16x128xf32>
    %269 = vector.extract_strided_slice %4 {offsets = [1, 0], sizes = [1, 128], strides = [1, 1]} : vector<3x128xf32> to vector<1x128xf32>
    %270 = vector.shape_cast %269 : vector<1x128xf32> to vector<128xf32>
    %271 = vector.shape_cast %270 : vector<128xf32> to vector<1x128xf32>
    %272 = vector.broadcast %271 : vector<1x128xf32> to vector<16x128xf32>
    %273 = arith.mulf %184, %272 : vector<16x128xf32>
    %274 = arith.addf %268, %273 : vector<16x128xf32>
    %275 = vector.extract_strided_slice %260 {offsets = [1, 0], sizes = [1, 128], strides = [1, 1]} : vector<3x128xf32> to vector<1x128xf32>
    %276 = vector.shape_cast %275 : vector<1x128xf32> to vector<128xf32>
    %277 = vector.shape_cast %276 : vector<128xf32> to vector<1x128xf32>
    %278 = vector.broadcast %277 : vector<1x128xf32> to vector<16x128xf32>
    %279 = arith.mulf %23, %278 : vector<16x128xf32>
    %280 = arith.addf %274, %279 : vector<16x128xf32>
    %c1_i32_62 = arith.constant 1 : i32
    %281 = tpu.dynamic_rotate %106 by %c1_i32_62 dim 0 : vector<16x128xf32>, i32 -> vector<16x128xf32>
    %282 = vector.extract_strided_slice %2 {offsets = [0, 0], sizes = [1, 128], strides = [1, 1]} : vector<3x128xf32> to vector<1x128xf32>
    %283 = vector.shape_cast %282 : vector<1x128xf32> to vector<128xf32>
    %284 = vector.shape_cast %283 : vector<128xf32> to vector<1x128xf32>
    %285 = vector.broadcast %284 : vector<1x128xf32> to vector<16x128xf32>
    %286 = arith.mulf %281, %285 : vector<16x128xf32>
    %c1_i32_63 = arith.constant 1 : i32
    %287 = tpu.dynamic_rotate %184 by %c1_i32_63 dim 0 : vector<16x128xf32>, i32 -> vector<16x128xf32>
    %288 = vector.extract_strided_slice %4 {offsets = [0, 0], sizes = [1, 128], strides = [1, 1]} : vector<3x128xf32> to vector<1x128xf32>
    %289 = vector.shape_cast %288 : vector<1x128xf32> to vector<128xf32>
    %290 = vector.shape_cast %289 : vector<128xf32> to vector<1x128xf32>
    %291 = vector.broadcast %290 : vector<1x128xf32> to vector<16x128xf32>
    %292 = arith.mulf %287, %291 : vector<16x128xf32>
    %293 = arith.addf %286, %292 : vector<16x128xf32>
    %c1_i32_64 = arith.constant 1 : i32
    %294 = tpu.dynamic_rotate %23 by %c1_i32_64 dim 0 : vector<16x128xf32>, i32 -> vector<16x128xf32>
    %295 = vector.extract_strided_slice %260 {offsets = [0, 0], sizes = [1, 128], strides = [1, 1]} : vector<3x128xf32> to vector<1x128xf32>
    %296 = vector.shape_cast %295 : vector<1x128xf32> to vector<128xf32>
    %297 = vector.shape_cast %296 : vector<128xf32> to vector<1x128xf32>
    %298 = vector.broadcast %297 : vector<1x128xf32> to vector<16x128xf32>
    %299 = arith.mulf %294, %298 : vector<16x128xf32>
    %300 = arith.addf %293, %299 : vector<16x128xf32>
    %cst_65 = arith.constant 0.000000e+00 : f32
    %301 = vector.shape_cast %17 : vector<16x1xi1> to vector<16x1xi1>
    %302 = vector.broadcast %301 : vector<16x1xi1> to vector<16x128xi1>
    %303 = vector.broadcast %cst_65 : f32 to vector<16x128xf32>
    %304 = arith.select %302, %300, %303 : vector<16x128xi1>, vector<16x128xf32>
    %305 = arith.addf %280, %304 : vector<16x128xf32>
    %c15_i32_66 = arith.constant 15 : i32
    %306 = tpu.dynamic_rotate %106 by %c15_i32_66 dim 0 : vector<16x128xf32>, i32 -> vector<16x128xf32>
    %307 = vector.extract_strided_slice %2 {offsets = [2, 0], sizes = [1, 128], strides = [1, 1]} : vector<3x128xf32> to vector<1x128xf32>
    %308 = vector.shape_cast %307 : vector<1x128xf32> to vector<128xf32>
    %309 = vector.shape_cast %308 : vector<128xf32> to vector<1x128xf32>
    %310 = vector.broadcast %309 : vector<1x128xf32> to vector<16x128xf32>
    %311 = arith.mulf %306, %310 : vector<16x128xf32>
    %c15_i32_67 = arith.constant 15 : i32
    %312 = tpu.dynamic_rotate %184 by %c15_i32_67 dim 0 : vector<16x128xf32>, i32 -> vector<16x128xf32>
    %313 = vector.extract_strided_slice %4 {offsets = [2, 0], sizes = [1, 128], strides = [1, 1]} : vector<3x128xf32> to vector<1x128xf32>
    %314 = vector.shape_cast %313 : vector<1x128xf32> to vector<128xf32>
    %315 = vector.shape_cast %314 : vector<128xf32> to vector<1x128xf32>
    %316 = vector.broadcast %315 : vector<1x128xf32> to vector<16x128xf32>
    %317 = arith.mulf %312, %316 : vector<16x128xf32>
    %318 = arith.addf %311, %317 : vector<16x128xf32>
    %c15_i32_68 = arith.constant 15 : i32
    %319 = tpu.dynamic_rotate %23 by %c15_i32_68 dim 0 : vector<16x128xf32>, i32 -> vector<16x128xf32>
    %320 = vector.extract_strided_slice %260 {offsets = [2, 0], sizes = [1, 128], strides = [1, 1]} : vector<3x128xf32> to vector<1x128xf32>
    %321 = vector.shape_cast %320 : vector<1x128xf32> to vector<128xf32>
    %322 = vector.shape_cast %321 : vector<128xf32> to vector<1x128xf32>
    %323 = vector.broadcast %322 : vector<1x128xf32> to vector<16x128xf32>
    %324 = arith.mulf %319, %323 : vector<16x128xf32>
    %325 = arith.addf %318, %324 : vector<16x128xf32>
    %cst_69 = arith.constant 0.000000e+00 : f32
    %326 = vector.shape_cast %19 : vector<16x1xi1> to vector<16x1xi1>
    %327 = vector.broadcast %326 : vector<16x1xi1> to vector<16x128xi1>
    %328 = vector.broadcast %cst_69 : f32 to vector<16x128xf32>
    %329 = arith.select %327, %325, %328 : vector<16x128xi1>, vector<16x128xf32>
    %330 = arith.addf %305, %329 : vector<16x128xf32>
    %c0_70 = arith.constant 0 : index
    %c3 = arith.constant 3 : index
    %c0_71 = arith.constant 0 : index
    %c0_72 = arith.constant 0 : index
    %331 = vector.load %arg8[%c0_70, %c3, %c0_71, %c0_72] : memref<1x4x16x128xf32, #tpu.memory_space<vmem>>, vector<1x1x16x128xf32>
    %332 = vector.shape_cast %331 : vector<1x1x16x128xf32> to vector<16x128xf32>
    %333 = vector.shape_cast %330 : vector<16x128xf32> to vector<1x1x16x128xf32>
    tpu.vector_store %arg8[%c0_70, %c3, %c0_71, %c0_72], %333 {strides = array<i32>} : memref<1x4x16x128xf32, #tpu.memory_space<vmem>>, vector<1x1x16x128xf32>,
    return
  }
  func.func @transform_0(%arg0: i32, %arg1: i32, %arg2: i32) -> (i32, i32, i32, i32) {
    %c0_i32 = arith.constant 0 : i32
    %c0_i32_0 = arith.constant 0 : i32
    return %arg0, %arg2, %c0_i32, %arg1 : i32, i32, i32, i32
  }
  func.func @transform_1(%arg0: i32, %arg1: i32, %arg2: i32) -> (i32, i32, i32, i32) {
    %c4_i32 = arith.constant 4 : i32
    %0 = arith.muli %arg2, %c4_i32 : i32
    %c1_i32 = arith.constant 1 : i32
    %1 = arith.subi %0, %c1_i32 : i32
    %c0_i32 = arith.constant 0 : i32
    %2 = arith.maxsi %1, %c0_i32 : i32
    %c0_i32_0 = arith.constant 0 : i32
    %c0_i32_1 = arith.constant 0 : i32
    return %arg0, %2, %c0_i32_0, %arg1 : i32, i32, i32, i32
  }
  func.func @transform_2(%arg0: i32, %arg1: i32, %arg2: i32) -> (i32, i32, i32, i32) {
    %c4_i32 = arith.constant 4 : i32
    %0 = arith.muli %arg2, %c4_i32 : i32
    %c4_i32_0 = arith.constant 4 : i32
    %1 = arith.addi %0, %c4_i32_0 : i32
    %c15_i32 = arith.constant 15 : i32
    %2 = arith.minsi %1, %c15_i32 : i32
    %c0_i32 = arith.constant 0 : i32
    %c0_i32_1 = arith.constant 0 : i32
    return %arg0, %2, %c0_i32, %arg1 : i32, i32, i32, i32
  }
  func.func @transform_3(%arg0: i32, %arg1: i32, %arg2: i32) -> (i32, i32, i32) {
    %c0_i32 = arith.constant 0 : i32
    %c0_i32_0 = arith.constant 0 : i32
    %c0_i32_1 = arith.constant 0 : i32
    return %c0_i32, %c0_i32_0, %arg1 : i32, i32, i32
  }
  func.func @transform_4(%arg0: i32, %arg1: i32, %arg2: i32) -> (i32, i32) {
    %c0_i32 = arith.constant 0 : i32
    %c0_i32_0 = arith.constant 0 : i32
    return %c0_i32, %arg1 : i32, i32
  }
  func.func @transform_5(%arg0: i32, %arg1: i32, %arg2: i32) -> (i32, i32, i32, i32) {
    %c0_i32 = arith.constant 0 : i32
    %c0_i32_0 = arith.constant 0 : i32
    return %arg0, %arg2, %c0_i32, %arg1 : i32, i32, i32, i32
  }
}

</mosaic_0001>

<llo_original>
// kernel: tpu_custom_call.1
$region0: #{tpu_custom_call.1}
  #allocation0 [shape = 'u32[]', space=smem, size = 0x4, offset = 0x4, fixed_abs, tag = 'smem constant byte address 0x4 - core index']
  #allocation1 [shape = 'u32[72,128]{1,0:T(1,128)}', space=vmem, size = 0x9000, scoped, tag = 'internal scratch']
  %s0 = inlined_call_operand.hbm [shape: f32[2,16,16,128], index: 0, kind: input, shape index: {}]
  %s1 = inlined_call_operand.hbm [shape: f32[2,16,16,128], index: 1, kind: input, shape index: {}]
  %s2 = inlined_call_operand.hbm [shape: f32[2,16,16,128], index: 2, kind: input, shape index: {}]
  %s3 = inlined_call_operand.hbm [shape: f32[3,3,128], index: 3, kind: input, shape index: {}]
  %s4 = inlined_call_operand.vmem [shape: f32[1,128], index: 4, kind: input, shape index: {}]
  %s5 = inlined_call_operand.hbm [shape: f32[2,16,16,128], index: 5, kind: output, shape index: {}]
  %s6 = sld [smem:[#allocation0]]
  $region69: #{tpu_custom_call.1} parent=0
    _
  %s8 = ssub.s32 1, %s6
  %s9 = scalar_select 0, %s8, %s6
  $region1: #{tpu_custom_call.1} parent=0
    #allocation2 [shape = 'u8[65536]{0}', space=vmem, size = 0x10000, scoped, tag = 'input window, operand 0']
    #allocation3 [shape = 's32[2]{0}', space=sflag, size = 0x8, scoped, tag = 'scoped memory for tpu_custom_call.1']
    #allocation4 [shape = 's32[2]{0}', space=sflag, size = 0x8, scoped, tag = 'scoped memory for tpu_custom_call.1']
    #allocation5 [shape = 'u8[16384]{0}', space=vmem, size = 0x4000, scoped, tag = 'input window, operand 1']
    #allocation6 [shape = 's32[2]{0}', space=sflag, size = 0x8, scoped, tag = 'scoped memory for tpu_custom_call.1']
    #allocation7 [shape = 'u8[16384]{0}', space=vmem, size = 0x4000, scoped, tag = 'input window, operand 2']
    #allocation8 [shape = 'u8[6144]{0}', space=vmem, size = 0x1800, scoped, tag = 'input window, operand 3, single buffered']
    #allocation9 [shape = 's32[1]{0}', space=sflag, size = 0x4, scoped, tag = 'scoped memory for tpu_custom_call.1']
    #allocation10 [shape = 'u8[65536]{0}', space=vmem, size = 0x10000, scoped, tag = 'output window, operand 0']
    %10 = vsyncpa [#allocation3], 0
    %s11 = scalar_lea.sflag [#allocation3], 1
    %12 = vsyncpa %s11, 0
    %13 = vsyncpa [#allocation6], 0
    %s14 = scalar_lea.sflag [#allocation6], 1
    %15 = vsyncpa %s14, 0
    %16 = vsyncpa [#allocation9], 0
    %17 = vsyncpa [#allocation4], 0
    %s18 = scalar_lea.sflag [#allocation4], 1
    %19 = vsyncpa %s18, 0
    loop: start=0, step=1, limit=10
    $region2: #{tpu_custom_call.1} parent=1 // loop_pre_header
      _
    $region3: #{tpu_custom_call.1} parent=1 // loop_header
      %s21 = sphi 0, %s25
      %p22 = scmp.ge.s32.totalorder %s21, 10
      %s28 = sphi 0, %s47
      %s29 = sphi 0, %s43
      %s30 = sphi 0, %s39
      %s31 = sphi 0, %s28
      %s32 = sphi 0, %s29
      %s33 = sphi 0, %s30
      %s34 = sphi 0, %s31
      %s35 = sphi 0, %s32
      %s36 = sphi 0, %s33
      %s54 = sphi 0, %s56
      %s57 = sphi 0, %s54
      %s58 = sphi 0, %s57
      %s74 = sphi 0, %s58
      %s92 = sphi 0, %s94
      %s95 = sphi 0, %s92
      %s96 = sphi 0, %s95
      %s112 = sphi 0, %s96
      %s130 = sphi 0, %s132
      %s133 = sphi 0, %s130
      %s134 = sphi 0, %s133
      %s150 = sphi 0, %s134
      %s156 = sphi 0, %s158
      %s159 = sphi 0, %s156
      %s160 = sphi 0, %s159
      %s176 = sphi 0, %s160
      %s182 = sphi 0, %s184
      %s185 = sphi 0, %s182
      %s186 = sphi 0, %s185
      %s202 = sphi 0, %s186
      %s212 = sphi 0, %s214
      %s215 = sphi 0, %s212
      %s216 = sphi 0, %s215
      %s232 = sphi 0, %s216
    $region4: #{tpu_custom_call.1} parent=1 // loop_header_branch
      %24 = sbr.rel (%p22) target = $region8
    $region5: #{tpu_custom_call.1} parent=1 // loop_body
      %s26 = ssub.s32 %s21, 1
      %s27 = ssub.s32 %s21, 2
      %s37 = sadd.s32 1, %s30
      %p38 = scmp.ge.s32.totalorder %s37, 4
      %s39 = scalar_select %p38, 0, %s37
      %s40 = sadd.s32 1, %s29
      %s41 = scalar_select %p38, %s40, %s29
      %p42 = scmp.ge.s32.totalorder %s41, 1
      %s43 = scalar_select %p42, 0, %s41
      %s44 = sadd.s32 1, %s28
      %s45 = scalar_select %p42, %s44, %s28
      %p46 = scmp.ge.s32.totalorder %s45, 2
      %s47 = scalar_select %p46, 0, %s45
      %s48 = ssub.s32 %s28, %s47
      %s49 = ssub.s32 %s30, %s39
      %s50 = sor.u32 %s48, %s49
      %s51 = ssub.s32 %s29, %s43
      %s52 = sor.u32 %s50, %s51
      %p53 = scmp.eq.s32.totalorder %s52, 0
      %s55 = sadd.s32 %s54, 1
      %s56 = scalar_select %p53, %s54, %s55
      %p59 = pneg %p53
      %p60 = scmp.eq.s32.totalorder %s21, 7
      %p61 = por %p59, %p60
      %p62 = scmp.ne.s32.totalorder %s54, %s57
      %p63 = scmp.eq.s32.totalorder %s21, 0
      %p64 = por %p62, %p63
      %p65 = scmp.ne.s32.totalorder %s54, %s57
      %p66 = scmp.eq.s32.totalorder %s26, 7
      %p67 = por %p65, %p66
      %p68 = scmp.ne.s32.totalorder %s57, %s58
      %p69 = scmp.eq.s32.totalorder %s26, 0
      %p70 = por %p68, %p69
      %p71 = scmp.ne.s32.totalorder %s57, %s58
      %p72 = scmp.eq.s32.totalorder %s27, 7
      %p73 = por %p71, %p72
      %p75 = scmp.ne.s32.totalorder %s58, %s74
      %p76 = scmp.eq.s32.totalorder %s27, 0
      %p77 = por %p75, %p76
      %s78 = smul.u32 %s30, 4
      %s79 = ssub.s32 %s78, 1
      %p80 = scmp.gt.s32.totalorder %s79, 0
      %s81 = scalar_select %p80, %s79, 0
      %s82 = smul.u32 %s39, 4
      %s83 = ssub.s32 %s82, 1
      %p84 = scmp.gt.s32.totalorder %s83, 0
      %s85 = scalar_select %p84, %s83, 0
      %s86 = ssub.s32 %s28, %s47
      %s87 = ssub.s32 %s81, %s85
      %s88 = sor.u32 %s86, %s87
      %s89 = ssub.s32 %s29, %s43
      %s90 = sor.u32 %s88, %s89
      %p91 = scmp.eq.s32.totalorder %s90, 0
      %s93 = sadd.s32 %s92, 1
      %s94 = scalar_select %p91, %s92, %s93
      %p97 = pneg %p91
      %p98 = scmp.eq.s32.totalorder %s21, 7
      %p99 = por %p97, %p98
      %p100 = scmp.ne.s32.totalorder %s92, %s95
      %p101 = scmp.eq.s32.totalorder %s21, 0
      %p102 = por %p100, %p101
      %p103 = scmp.ne.s32.totalorder %s92, %s95
      %p104 = scmp.eq.s32.totalorder %s26, 7
      %p105 = por %p103, %p104
      %p106 = scmp.ne.s32.totalorder %s95, %s96
      %p107 = scmp.eq.s32.totalorder %s26, 0
      %p108 = por %p106, %p107
      %p109 = scmp.ne.s32.totalorder %s95, %s96
      %p110 = scmp.eq.s32.totalorder %s27, 7
      %p111 = por %p109, %p110
      %p113 = scmp.ne.s32.totalorder %s96, %s112
      %p114 = scmp.eq.s32.totalorder %s27, 0
      %p115 = por %p113, %p114
      %s116 = smul.u32 %s30, 4
      %s117 = sadd.s32 %s116, 4
      %p118 = scmp.lt.s32.totalorder %s117, 15
      %s119 = scalar_select %p118, %s117, 15
      %s120 = smul.u32 %s39, 4
      %s121 = sadd.s32 %s120, 4
      %p122 = scmp.lt.s32.totalorder %s121, 15
      %s123 = scalar_select %p122, %s121, 15
      %s124 = ssub.s32 %s28, %s47
      %s125 = ssub.s32 %s119, %s123
      %s126 = sor.u32 %s124, %s125
      %s127 = ssub.s32 %s29, %s43
      %s128 = sor.u32 %s126, %s127
      %p129 = scmp.eq.s32.totalorder %s128, 0
      %s131 = sadd.s32 %s130, 1
      %s132 = scalar_select %p129, %s130, %s131
      %p135 = pneg %p129
      %p136 = scmp.eq.s32.totalorder %s21, 7
      %p137 = por %p135, %p136
      %p138 = scmp.ne.s32.totalorder %s130, %s133
      %p139 = scmp.eq.s32.totalorder %s21, 0
      %p140 = por %p138, %p139
      %p141 = scmp.ne.s32.totalorder %s130, %s133
      %p142 = scmp.eq.s32.totalorder %s26, 7
      %p143 = por %p141, %p142
      %p144 = scmp.ne.s32.totalorder %s133, %s134
      %p145 = scmp.eq.s32.totalorder %s26, 0
      %p146 = por %p144, %p145
      %p147 = scmp.ne.s32.totalorder %s133, %s134
      %p148 = scmp.eq.s32.totalorder %s27, 7
      %p149 = por %p147, %p148
      %p151 = scmp.ne.s32.totalorder %s134, %s150
      %p152 = scmp.eq.s32.totalorder %s27, 0
      %p153 = por %p151, %p152
      %s154 = ssub.s32 %s29, %s43
      %p155 = scmp.eq.s32.totalorder %s154, 0
      %s157 = sadd.s32 %s156, 1
      %s158 = scalar_select %p155, %s156, %s157
      %p161 = pneg %p155
      %p162 = scmp.eq.s32.totalorder %s21, 7
      %p163 = por %p161, %p162
      %p164 = scmp.ne.s32.totalorder %s156, %s159
      %p165 = scmp.eq.s32.totalorder %s21, 0
      %p166 = por %p164, %p165
      %p167 = scmp.ne.s32.totalorder %s156, %s159
      %p168 = scmp.eq.s32.totalorder %s26, 7
      %p169 = por %p167, %p168
      %p170 = scmp.ne.s32.totalorder %s159, %s160
      %p171 = scmp.eq.s32.totalorder %s26, 0
      %p172 = por %p170, %p171
      %p173 = scmp.ne.s32.totalorder %s159, %s160
      %p174 = scmp.eq.s32.totalorder %s27, 7
      %p175 = por %p173, %p174
      %p177 = scmp.ne.s32.totalorder %s160, %s176
      %p178 = scmp.eq.s32.totalorder %s27, 0
      %p179 = por %p177, %p178
      %s180 = ssub.s32 %s29, %s43
      %p181 = scmp.eq.s32.totalorder %s180, 0
      %s183 = sadd.s32 %s182, 1
      %s184 = scalar_select %p181, %s182, %s183
      %p187 = pneg %p181
      %p188 = scmp.eq.s32.totalorder %s21, 7
      %p189 = por %p187, %p188
      %p190 = scmp.ne.s32.totalorder %s182, %s185
      %p191 = scmp.eq.s32.totalorder %s21, 0
      %p192 = por %p190, %p191
      %p193 = scmp.ne.s32.totalorder %s182, %s185
      %p194 = scmp.eq.s32.totalorder %s26, 7
      %p195 = por %p193, %p194
      %p196 = scmp.ne.s32.totalorder %s185, %s186
      %p197 = scmp.eq.s32.totalorder %s26, 0
      %p198 = por %p196, %p197
      %p199 = scmp.ne.s32.totalorder %s185, %s186
      %p200 = scmp.eq.s32.totalorder %s27, 7
      %p201 = por %p199, %p200
      %p203 = scmp.ne.s32.totalorder %s186, %s202
      %p204 = scmp.eq.s32.totalorder %s27, 0
      %p205 = por %p203, %p204
      %s206 = ssub.s32 %s28, %s47
      %s207 = ssub.s32 %s30, %s39
      %s208 = sor.u32 %s206, %s207
      %s209 = ssub.s32 %s29, %s43
      %s210 = sor.u32 %s208, %s209
      %p211 = scmp.eq.s32.totalorder %s210, 0
      %s213 = sadd.s32 %s212, 1
      %s214 = scalar_select %p211, %s212, %s213
      %p217 = pneg %p211
      %p218 = scmp.eq.s32.totalorder %s21, 7
      %p219 = por %p217, %p218
      %p220 = scmp.ne.s32.totalorder %s212, %s215
      %p221 = scmp.eq.s32.totalorder %s21, 0
      %p222 = por %p220, %p221
      %p223 = scmp.ne.s32.totalorder %s212, %s215
      %p224 = scmp.eq.s32.totalorder %s26, 7
      %p225 = por %p223, %p224
      %p226 = scmp.ne.s32.totalorder %s215, %s216
      %p227 = scmp.eq.s32.totalorder %s26, 0
      %p228 = por %p226, %p227
      %p229 = scmp.ne.s32.totalorder %s215, %s216
      %p230 = scmp.eq.s32.totalorder %s27, 7
      %p231 = por %p229, %p230
      %p233 = scmp.ne.s32.totalorder %s216, %s232
      %p234 = scmp.eq.s32.totalorder %s27, 0
      %p235 = por %p233, %p234
      %p236 = scmp.le.s32.totalorder 1, %s21
      %p237 = scmp.lt.s32.totalorder %s21, 9
      %p238 = pnand %p236, %p237
      %p239 = pneg %p238
      // Predicated region
      $region9: #{tpu_custom_call.1} parent=5 // pred_check
        _
      $region10: #{tpu_custom_call.1} parent=5 // pred_check_branch
        %241 = sbr.rel (%p238) target = $region12
      $region11: #{tpu_custom_call.1} parent=5 // pred_region
        %s242 = ssub.s32 %s21, 1
        // Predicated region
        $region13: #{tpu_custom_call.1} parent=11 // pred_check
          %p243 = pneg %p172
        $region14: #{tpu_custom_call.1} parent=11 // pred_check_branch
          %245 = sbr.rel (%p243) target = $region16
        $region15: #{tpu_custom_call.1} parent=11 // pred_region
          %247 = vsyncadd [#allocation9], 0
          %s248 = smul.addr %s32, 4
          %s249 = scalar_lea.hbm %s3, %s248
          %s250 = sshll.u32 %s249, 4
          %s251 = int_to_ptr.hbm [resolvable:$true] %s250
          %s252 = sshll.u32 [#allocation8], 4
          %s253 = int_to_ptr.vmem [resolvable:$true] %s252
          %258 = dma.hbm_to_vmem [thread:$0]  %s251, 192, %s253, [#allocation9], 64, 64, 4
        $region16: #{tpu_custom_call.1} parent=11 // pred_fallthru
          _
        // Predicated region
        $region17: #{tpu_custom_call.1} parent=11 // pred_check
          %p259 = pneg %p198
        $region18: #{tpu_custom_call.1} parent=11 // pred_check_branch
          %261 = sbr.rel (%p259) target = $region20
        $region19: #{tpu_custom_call.1} parent=11 // pred_region
          %p262 = scmp.lt.s32.totalorder %s32, 0
          %s263 = scalar_select %p262, %s32, 0
          %s264 = scalar_lea.vmem %s4, %s263
        $region20: #{tpu_custom_call.1} parent=11 // pred_fallthru
          _
      $region12: #{tpu_custom_call.1} parent=5 // pred_fallthru
        _
      %p265 = scmp.lt.s32.totalorder %s21, 8
      // Predicated region
      $region21: #{tpu_custom_call.1} parent=5 // pred_check
        %p266 = pneg %p265
      $region22: #{tpu_custom_call.1} parent=5 // pred_check_branch
        %268 = sbr.rel (%p266) target = $region24
      $region23: #{tpu_custom_call.1} parent=5 // pred_region
        // Predicated region
        $region25: #{tpu_custom_call.1} parent=23 // pred_check
          %p269 = pneg %p64
        $region26: #{tpu_custom_call.1} parent=23 // pred_check_branch
          %271 = sbr.rel (%p269) target = $region28
        $region27: #{tpu_custom_call.1} parent=23 // pred_region
          %s272 = sand.u32 %s54, 1
          %s273 = scalar_lea.sflag [#allocation3], %s272
          %s274 = sand.u32 %s54, 1
          %s275 = smul.addr %s274, 64
          %s276 = scalar_lea.vmem [#allocation2], %s275
          %s277 = smul.u32 4, %s30
          %279 = vsyncadd %s273, 0
          %s280 = smul.addr %s277, 2
          %s281 = sadd.s32 %s29, %s280
          %s282 = smul.addr %s28, 32
          %s283 = sadd.s32 %s281, %s282
          %s284 = smul.addr %s283, 8
          %s285 = scalar_lea.hbm %s0, %s284
          %s286 = sshll.u32 %s285, 4
          %s287 = int_to_ptr.hbm [resolvable:$true] %s286
          %s288 = sshll.u32 %s276, 4
          %s289 = int_to_ptr.vmem [resolvable:$true] %s288
          %294 = dma.hbm_to_vmem [thread:$0]  %s287, 1024, %s289, %s273, 128, 128, 8
        $region28: #{tpu_custom_call.1} parent=23 // pred_fallthru
          _
        // Predicated region
        $region29: #{tpu_custom_call.1} parent=23 // pred_check
          %p295 = pneg %p102
        $region30: #{tpu_custom_call.1} parent=23 // pred_check_branch
          %297 = sbr.rel (%p295) target = $region32
        $region31: #{tpu_custom_call.1} parent=23 // pred_region
          %s298 = sand.u32 %s21, 1
          %s299 = scalar_lea.sflag [#allocation6], %s298
          %s300 = sand.u32 %s92, 1
          %s301 = smul.addr %s300, 16
          %s302 = scalar_lea.vmem [#allocation5], %s301
          %s303 = smul.u32 %s30, 4
          %s304 = ssub.s32 %s303, 1
          %p305 = scmp.gt.s32.totalorder %s304, 0
          %s306 = scalar_select %p305, %s304, 0
          %308 = vsyncadd %s299, 0
          %s309 = smul.addr %s306, 2
          %s310 = sadd.s32 %s29, %s309
          %s311 = smul.addr %s28, 32
          %s312 = sadd.s32 %s310, %s311
          %s313 = smul.addr %s312, 8
          %s314 = scalar_lea.hbm %s1, %s313
          %s315 = sshll.u32 %s314, 4
          %s316 = int_to_ptr.hbm [resolvable:$true] %s315
          %s317 = sshll.u32 %s302, 4
          %s318 = int_to_ptr.vmem [resolvable:$true] %s317
          %323 = dma.hbm_to_vmem [thread:$0]  %s316, 256, %s318, %s299, 128, 128, 8
        $region32: #{tpu_custom_call.1} parent=23 // pred_fallthru
          _
        // Predicated region
        $region33: #{tpu_custom_call.1} parent=23 // pred_check
          %p324 = pneg %p140
        $region34: #{tpu_custom_call.1} parent=23 // pred_check_branch
          %326 = sbr.rel (%p324) target = $region36
        $region35: #{tpu_custom_call.1} parent=23 // pred_region
          %s327 = sand.u32 %s21, 1
          %s328 = scalar_lea.sflag [#allocation6], %s327
          %s329 = sand.u32 %s130, 1
          %s330 = smul.addr %s329, 16
          %s331 = scalar_lea.vmem [#allocation7], %s330
          %s332 = smul.u32 %s30, 4
          %s333 = sadd.s32 %s332, 4
          %p334 = scmp.lt.s32.totalorder %s333, 15
          %s335 = scalar_select %p334, %s333, 15
          %337 = vsyncadd %s328, 0
          %s338 = smul.addr %s335, 2
          %s339 = sadd.s32 %s29, %s338
          %s340 = smul.addr %s28, 32
          %s341 = sadd.s32 %s339, %s340
          %s342 = smul.addr %s341, 8
          %s343 = scalar_lea.hbm %s2, %s342
          %s344 = sshll.u32 %s343, 4
          %s345 = int_to_ptr.hbm [resolvable:$true] %s344
          %s346 = sshll.u32 %s331, 4
          %s347 = int_to_ptr.vmem [resolvable:$true] %s346
          %352 = dma.hbm_to_vmem [thread:$0]  %s345, 256, %s347, %s328, 128, 128, 8
        $region36: #{tpu_custom_call.1} parent=23 // pred_fallthru
          _
      $region24: #{tpu_custom_call.1} parent=5 // pred_fallthru
        _
      %p353 = scmp.le.s32.totalorder 1, %s21
      %p354 = scmp.lt.s32.totalorder %s21, 9
      %p355 = pnand %p353, %p354
      %p356 = pneg %p355
      // Predicated region
      $region37: #{tpu_custom_call.1} parent=5 // pred_check
        _
      $region38: #{tpu_custom_call.1} parent=5 // pred_check_branch
        %358 = sbr.rel (%p355) target = $region40
      $region39: #{tpu_custom_call.1} parent=5 // pred_region
        %s359 = ssub.s32 %s21, 1
        %s360 = sand.u32 %s57, 1
        %s361 = scalar_lea.sflag [#allocation3], %s360
        %s362 = sand.u32 %s57, 1
        %s363 = smul.addr %s362, 64
        %s364 = scalar_lea.vmem [#allocation2], %s363
        // Predicated region
        $region41: #{tpu_custom_call.1} parent=39 // pred_check
          %p365 = pneg %p70
        $region42: #{tpu_custom_call.1} parent=39 // pred_check_branch
          %367 = sbr.rel (%p365) target = $region44
        $region43: #{tpu_custom_call.1} parent=39 // pred_region
          %369 = dma.done %s361, 1024
        $region44: #{tpu_custom_call.1} parent=39 // pred_fallthru
          _
        %s370 = sand.u32 %s26, 1
        %s371 = scalar_lea.sflag [#allocation6], %s370
        %s372 = sand.u32 %s95, 1
        %s373 = smul.addr %s372, 16
        %s374 = scalar_lea.vmem [#allocation5], %s373
        // Predicated region
        $region45: #{tpu_custom_call.1} parent=39 // pred_check
          %p375 = pneg %p108
        $region46: #{tpu_custom_call.1} parent=39 // pred_check_branch
          %377 = sbr.rel (%p375) target = $region48
        $region47: #{tpu_custom_call.1} parent=39 // pred_region
          %379 = dma.done %s371, 256
        $region48: #{tpu_custom_call.1} parent=39 // pred_fallthru
          _
        %s380 = sand.u32 %s26, 1
        %s381 = scalar_lea.sflag [#allocation6], %s380
        %s382 = sand.u32 %s133, 1
        %s383 = smul.addr %s382, 16
        %s384 = scalar_lea.vmem [#allocation7], %s383
        // Predicated region
        $region49: #{tpu_custom_call.1} parent=39 // pred_check
          %p385 = pneg %p146
        $region50: #{tpu_custom_call.1} parent=39 // pred_check_branch
          %387 = sbr.rel (%p385) target = $region52
        $region51: #{tpu_custom_call.1} parent=39 // pred_region
          %389 = dma.done %s381, 256
        $region52: #{tpu_custom_call.1} parent=39 // pred_fallthru
          _
        // Predicated region
        $region53: #{tpu_custom_call.1} parent=39 // pred_check
          %p390 = pneg %p172
        $region54: #{tpu_custom_call.1} parent=39 // pred_check_branch
          %392 = sbr.rel (%p390) target = $region56
        $region55: #{tpu_custom_call.1} parent=39 // pred_region
          %394 = dma.done [#allocation9], 192
        $region56: #{tpu_custom_call.1} parent=39 // pred_fallthru
          _
        %s395 = sand.u32 %s57, 1
        %s396 = scalar_lea.sflag [#allocation3], %s395
        %s397 = sand.u32 %s57, 1
        %s398 = smul.addr %s397, 64
        %s399 = scalar_lea.vmem [#allocation2], %s398
        %p400 = pneg %p70
        %p401 = pneg %p67
        %s402 = sand.u32 %s26, 1
        %s403 = scalar_lea.sflag [#allocation6], %s402
        %s404 = sand.u32 %s95, 1
        %s405 = smul.addr %s404, 16
        %s406 = scalar_lea.vmem [#allocation5], %s405
        %p407 = pneg %p108
        %p408 = pneg %p105
        %s409 = sand.u32 %s26, 1
        %s410 = scalar_lea.sflag [#allocation6], %s409
        %s411 = sand.u32 %s133, 1
        %s412 = smul.addr %s411, 16
        %s413 = scalar_lea.vmem [#allocation7], %s412
        %p414 = pneg %p146
        %p415 = pneg %p143
        %p416 = pneg %p172
        %p417 = pneg %p169
        %p418 = scmp.lt.s32.totalorder %s32, 0
        %s419 = scalar_select %p418, %s32, 0
        %s420 = scalar_lea.vmem %s4, %s419
        %p421 = pneg %p198
        %p422 = pneg %p195
        %p423 = pneg %p228
        %p424 = pneg %p225
        %s425 = sand.u32 %s215, 1
        %s426 = scalar_lea.sflag [#allocation4], %s425
        %s427 = sand.u32 %s215, 1
        %s428 = smul.addr %s427, 64
        %s429 = scalar_lea.vmem [#allocation10], %s428
        %s430 = smul.u32 4, %s33
        %s431 = smul.u32 %s33, 4
        %s432 = ssub.s32 %s431, 1
        %p433 = scmp.gt.s32.totalorder %s432, 0
        %s434 = scalar_select %p433, %s432, 0
        %s435 = smul.u32 %s33, 4
        %s436 = sadd.s32 %s435, 4
        %p437 = scmp.lt.s32.totalorder %s436, 15
        %s438 = scalar_select %p437, %s436, 15
        %p439 = scmp.lt.s32.totalorder %s32, 0
        %s440 = scalar_select %p439, %s32, 0
        %s441 = scalar_lea.vmem %s4, %s440
        %s442 = smul.u32 4, %s33
        %v443 = vld [vmem:[#allocation8] sm:$0x7]
        %v444 = vld [vmem:[#allocation8 + $0x4] sm:$0x7]
        %v445 = vld [vmem:[#allocation8 + $0x8] sm:$0x7]
        %v446 = vld [vmem:[%s441] sm:$0x1]
        %p447 = scmp.gt.s32.totalorder %s33, 0
        %s448 = scalar_select %p447, 1, 0
        %s449 = scvt.s32.f32 %s448
        %p450 = scmp.lt.s32.totalorder %s33, 3
        %s451 = scalar_select %p450, 1, 0
        %s452 = scvt.s32.f32 %s451
        %v453 = vlaneseq
        %v454 = vshrl.u32 %v453, 7
        %v455 = vadd.s32 %v454, 8
        %vm456 = vcmp.gt.s32.totalorder %v454, 0
        %vm457 = vcmp.gt.s32.totalorder %v455, 0
        %vm458 = vcmp.lt.s32.totalorder %v454, 15
        %vm459 = vcmp.lt.s32.totalorder %v455, 15
        %v460 = vld [vmem:[%s374] sm:$0xff]
        %v461 = vld [vmem:[%s374 + $0x8] sm:$0xff]
        %v462 = vld [vmem:[%s384] sm:$0xff]
        %v463 = vld [vmem:[%s384 + $0x8] sm:$0xff]
        %v464 = vld [vmem:[%s364] sm:$0xff]
        %v465 = vld [vmem:[%s364 + $0x8] sm:$0xff]
        %s466 = scalar_lea.vmem %s364, 16 [#allocation2]
        %v467 = vld [vmem:[%s466] sm:$0xff]
        %v468 = vld [vmem:[%s466 + $0x8] sm:$0xff]
        %v469 = vstv %s449
        %v470 = vmul.f32 %v443, %v469
        %v471 = vperm.slane %v470, 1
        %v472 = vmul.f32 %v460, %v471
        %v473 = vmul.f32 %v461, %v471
        %v475 = vperm.slane %v446, 0
        %v477 = vadd.f32 %v475, %v472
        %v478 = vadd.f32 %v475, %v473
        %v479 = vperm.slane %v444, 1
        %v480 = vmul.f32 %v464, %v479
        %v481 = vmul.f32 %v465, %v479
        %v482 = vadd.f32 %v477, %v480
        %v483 = vadd.f32 %v478, %v481
        %v484 = vperm.slane %v445, 1
        %v485 = vmul.f32 %v467, %v484
        %v486 = vmul.f32 %v468, %v484
        %v487 = vadd.f32 %v482, %v485
        %v488 = vadd.f32 %v483, %v486
        %v489 = vrot.slane %v460, 7
        %v490 = vrot.slane %v461, 7
        %vm491 = vcmp.lt.s32.totalorder %v454, 1
        %v492 = vsel %vm491, %v489, %v490
        %v493 = vsel %vm491, %v490, %v489
        %v494 = vperm.slane %v470, 0
        %v495 = vmul.f32 %v493, %v494
        %v496 = vmul.f32 %v492, %v494
        %v497 = vrot.slane %v464, 7
        %v498 = vrot.slane %v465, 7
        %v499 = vsel %vm491, %v497, %v498
        %v500 = vsel %vm491, %v498, %v497
        %v501 = vperm.slane %v444, 0
        %v502 = vmul.f32 %v500, %v501
        %v503 = vmul.f32 %v499, %v501
        %v504 = vadd.f32 %v495, %v502
        %v505 = vadd.f32 %v496, %v503
        %v506 = vrot.slane %v467, 7
        %v507 = vrot.slane %v468, 7
        %v508 = vsel %vm491, %v506, %v507
        %v509 = vsel %vm491, %v507, %v506
        %v510 = vperm.slane %v445, 0
        %v511 = vmul.f32 %v509, %v510
        %v512 = vmul.f32 %v508, %v510
        %v513 = vadd.f32 %v504, %v511
        %v514 = vadd.f32 %v505, %v512
        %v515 = vsel %vm456, 1, 0
        %v516 = vsel %vm457, 1, 0
        %vm517 = vcmp.eq.s32.totalorder %v515, 1
        %vm518 = vcmp.eq.s32.totalorder %v516, 1
        %v519 = vsel %vm517, %v513, 0.0
        %v520 = vsel %vm518, %v514, 0.0
        %v521 = vadd.f32 %v487, %v519
        %v522 = vadd.f32 %v488, %v520
        %v523 = vrot.slane %v460, 1
        %v524 = vrot.slane %v461, 1
        %vm525 = vcmp.lt.s32.totalorder %v454, 7
        %v526 = vsel %vm525, %v523, %v524
        %v527 = vsel %vm525, %v524, %v523
        %v528 = vperm.slane %v470, 2
        %v529 = vmul.f32 %v526, %v528
        %v530 = vmul.f32 %v527, %v528
        %v531 = vrot.slane %v464, 1
        %v532 = vrot.slane %v465, 1
        %v533 = vsel %vm525, %v531, %v532
        %v534 = vsel %vm525, %v532, %v531
        %v535 = vperm.slane %v444, 2
        %v536 = vmul.f32 %v533, %v535
        %v537 = vmul.f32 %v534, %v535
        %v538 = vadd.f32 %v529, %v536
        %v539 = vadd.f32 %v530, %v537
        %v540 = vrot.slane %v467, 1
        %v541 = vrot.slane %v468, 1
        %v542 = vsel %vm525, %v540, %v541
        %v543 = vsel %vm525, %v541, %v540
        %v544 = vperm.slane %v445, 2
        %v545 = vmul.f32 %v542, %v544
        %v546 = vmul.f32 %v543, %v544
        %v547 = vadd.f32 %v538, %v545
        %v548 = vadd.f32 %v539, %v546
        %v549 = vsel %vm458, 1, 0
        %v550 = vsel %vm459, 1, 0
        %vm551 = vcmp.eq.s32.totalorder %v549, 1
        %vm552 = vcmp.eq.s32.totalorder %v550, 1
        %v553 = vsel %vm551, %v547, 0.0
        %v554 = vsel %vm552, %v548, 0.0
        %v555 = vadd.f32 %v521, %v553
        %v556 = vadd.f32 %v522, %v554
        %557 = vst [vmem:[%s429] sm:$0xff] %v555
        %558 = vst [vmem:[%s429 + $0x8] sm:$0xff] %v556
        %s559 = scalar_lea.vmem %s364, 32 [#allocation2]
        %v560 = vld [vmem:[%s559] sm:$0xff]
        %v561 = vld [vmem:[%s559 + $0x8] sm:$0xff]
        %v562 = vperm.slane %v443, 1
        %v563 = vmul.f32 %v464, %v562
        %v564 = vmul.f32 %v465, %v562
        %v565 = vadd.f32 %v475, %v563
        %v566 = vadd.f32 %v475, %v564
        %v567 = vmul.f32 %v467, %v479
        %v568 = vmul.f32 %v468, %v479
        %v569 = vadd.f32 %v565, %v567
        %v570 = vadd.f32 %v566, %v568
        %v571 = vmul.f32 %v560, %v484
        %v572 = vmul.f32 %v561, %v484
        %v573 = vadd.f32 %v569, %v571
        %v574 = vadd.f32 %v570, %v572
        %v575 = vperm.slane %v443, 0
        %v576 = vmul.f32 %v500, %v575
        %v577 = vmul.f32 %v499, %v575
        %v578 = vmul.f32 %v509, %v501
        %v579 = vmul.f32 %v508, %v501
        %v580 = vadd.f32 %v576, %v578
        %v581 = vadd.f32 %v577, %v579
        %v582 = vrot.slane %v560, 7
        %v583 = vrot.slane %v561, 7
        %v584 = vsel %vm491, %v582, %v583
        %v585 = vsel %vm491, %v583, %v582
        %v586 = vmul.f32 %v585, %v510
        %v587 = vmul.f32 %v584, %v510
        %v588 = vadd.f32 %v580, %v586
        %v589 = vadd.f32 %v581, %v587
        %v590 = vsel %vm517, %v588, 0.0
        %v591 = vsel %vm518, %v589, 0.0
        %v592 = vadd.f32 %v573, %v590
        %v593 = vadd.f32 %v574, %v591
        %v594 = vperm.slane %v443, 2
        %v595 = vmul.f32 %v533, %v594
        %v596 = vmul.f32 %v534, %v594
        %v597 = vmul.f32 %v542, %v535
        %v598 = vmul.f32 %v543, %v535
        %v599 = vadd.f32 %v595, %v597
        %v600 = vadd.f32 %v596, %v598
        %v601 = vrot.slane %v560, 1
        %v602 = vrot.slane %v561, 1
        %v603 = vsel %vm525, %v601, %v602
        %v604 = vsel %vm525, %v602, %v601
        %v605 = vmul.f32 %v603, %v544
        %v606 = vmul.f32 %v604, %v544
        %v607 = vadd.f32 %v599, %v605
        %v608 = vadd.f32 %v600, %v606
        %v609 = vsel %vm551, %v607, 0.0
        %v610 = vsel %vm552, %v608, 0.0
        %v611 = vadd.f32 %v592, %v609
        %v612 = vadd.f32 %v593, %v610
        %s613 = scalar_lea.vmem %s429, 16 [#allocation10]
        %614 = vst [vmem:[%s613] sm:$0xff] %v611
        %615 = vst [vmem:[%s613 + $0x8] sm:$0xff] %v612
        %s616 = scalar_lea.vmem %s364, 48 [#allocation2]
        %v617 = vld [vmem:[%s616] sm:$0xff]
        %v618 = vld [vmem:[%s616 + $0x8] sm:$0xff]
        %v619 = vmul.f32 %v467, %v562
        %v620 = vmul.f32 %v468, %v562
        %v621 = vadd.f32 %v475, %v619
        %v622 = vadd.f32 %v475, %v620
        %v623 = vmul.f32 %v560, %v479
        %v624 = vmul.f32 %v561, %v479
        %v625 = vadd.f32 %v621, %v623
        %v626 = vadd.f32 %v622, %v624
        %v627 = vmul.f32 %v617, %v484
        %v628 = vmul.f32 %v618, %v484
        %v629 = vadd.f32 %v625, %v627
        %v630 = vadd.f32 %v626, %v628
        %v631 = vmul.f32 %v509, %v575
        %v632 = vmul.f32 %v508, %v575
        %v633 = vmul.f32 %v585, %v501
        %v634 = vmul.f32 %v584, %v501
        %v635 = vadd.f32 %v631, %v633
        %v636 = vadd.f32 %v632, %v634
        %v637 = vrot.slane %v617, 7
        %v638 = vrot.slane %v618, 7
        %v639 = vsel %vm491, %v637, %v638
        %v640 = vsel %vm491, %v638, %v637
        %v641 = vmul.f32 %v640, %v510
        %v642 = vmul.f32 %v639, %v510
        %v643 = vadd.f32 %v635, %v641
        %v644 = vadd.f32 %v636, %v642
        %v645 = vsel %vm517, %v643, 0.0
        %v646 = vsel %vm518, %v644, 0.0
        %v647 = vadd.f32 %v629, %v645
        %v648 = vadd.f32 %v630, %v646
        %v649 = vmul.f32 %v542, %v594
        %v650 = vmul.f32 %v543, %v594
        %v651 = vmul.f32 %v603, %v535
        %v652 = vmul.f32 %v604, %v535
        %v653 = vadd.f32 %v649, %v651
        %v654 = vadd.f32 %v650, %v652
        %v655 = vrot.slane %v617, 1
        %v656 = vrot.slane %v618, 1
        %v657 = vsel %vm525, %v655, %v656
        %v658 = vsel %vm525, %v656, %v655
        %v659 = vmul.f32 %v657, %v544
        %v660 = vmul.f32 %v658, %v544
        %v661 = vadd.f32 %v653, %v659
        %v662 = vadd.f32 %v654, %v660
        %v663 = vsel %vm551, %v661, 0.0
        %v664 = vsel %vm552, %v662, 0.0
        %v665 = vadd.f32 %v647, %v663
        %v666 = vadd.f32 %v648, %v664
        %s667 = scalar_lea.vmem %s429, 32 [#allocation10]
        %668 = vst [vmem:[%s667] sm:$0xff] %v665
        %669 = vst [vmem:[%s667 + $0x8] sm:$0xff] %v666
        %v670 = vstv %s452
        %v671 = vmul.f32 %v445, %v670
        %v672 = vmul.f32 %v560, %v562
        %v673 = vmul.f32 %v561, %v562
        %v674 = vadd.f32 %v475, %v672
        %v675 = vadd.f32 %v475, %v673
        %v676 = vmul.f32 %v617, %v479
        %v677 = vmul.f32 %v618, %v479
        %v678 = vadd.f32 %v674, %v676
        %v679 = vadd.f32 %v675, %v677
        %v680 = vperm.slane %v671, 1
        %v681 = vmul.f32 %v462, %v680
        %v682 = vmul.f32 %v463, %v680
        %v683 = vadd.f32 %v678, %v681
        %v684 = vadd.f32 %v679, %v682
        %v685 = vmul.f32 %v585, %v575
        %v686 = vmul.f32 %v584, %v575
        %v687 = vmul.f32 %v640, %v501
        %v688 = vmul.f32 %v639, %v501
        %v689 = vadd.f32 %v685, %v687
        %v690 = vadd.f32 %v686, %v688
        %v691 = vrot.slane %v462, 7
        %v692 = vrot.slane %v463, 7
        %v693 = vsel %vm491, %v691, %v692
        %v694 = vsel %vm491, %v692, %v691
        %v695 = vperm.slane %v671, 0
        %v696 = vmul.f32 %v694, %v695
        %v697 = vmul.f32 %v693, %v695
        %v698 = vadd.f32 %v689, %v696
        %v699 = vadd.f32 %v690, %v697
        %v700 = vsel %vm517, %v698, 0.0
        %v701 = vsel %vm518, %v699, 0.0
        %v702 = vadd.f32 %v683, %v700
        %v703 = vadd.f32 %v684, %v701
        %v704 = vmul.f32 %v603, %v594
        %v705 = vmul.f32 %v604, %v594
        %v706 = vmul.f32 %v657, %v535
        %v707 = vmul.f32 %v658, %v535
        %v708 = vadd.f32 %v704, %v706
        %v709 = vadd.f32 %v705, %v707
        %v710 = vrot.slane %v462, 1
        %v711 = vrot.slane %v463, 1
        %v712 = vsel %vm525, %v710, %v711
        %v713 = vsel %vm525, %v711, %v710
        %v714 = vperm.slane %v671, 2
        %v715 = vmul.f32 %v712, %v714
        %v716 = vmul.f32 %v713, %v714
        %v717 = vadd.f32 %v708, %v715
        %v718 = vadd.f32 %v709, %v716
        %v719 = vsel %vm551, %v717, 0.0
        %v720 = vsel %vm552, %v718, 0.0
        %v721 = vadd.f32 %v702, %v719
        %v722 = vadd.f32 %v703, %v720
        %s723 = scalar_lea.vmem %s429, 48 [#allocation10]
        %724 = vst [vmem:[%s723] sm:$0xff] %v721
        %725 = vst [vmem:[%s723 + $0x8] sm:$0xff] %v722
        %s726 = sand.u32 %s215, 1
        %s727 = scalar_lea.sflag [#allocation4], %s726
        %s728 = sand.u32 %s215, 1
        %s729 = smul.addr %s728, 64
        %s730 = scalar_lea.vmem [#allocation10], %s729
        // Predicated region
        $region57: #{tpu_custom_call.1} parent=39 // pred_check
          %p731 = pneg %p225
        $region58: #{tpu_custom_call.1} parent=39 // pred_check_branch
          %733 = sbr.rel (%p731) target = $region60
        $region59: #{tpu_custom_call.1} parent=39 // pred_region
          %s734 = smul.u32 4, %s33
          %736 = vsyncadd %s727, 0
          %s737 = smul.addr %s734, 2
          %s738 = sadd.s32 %s32, %s737
          %s739 = smul.addr %s31, 32
          %s740 = sadd.s32 %s738, %s739
          %s741 = smul.addr %s740, 8
          %s742 = scalar_lea.hbm %s5, %s741
          %s743 = sshll.u32 %s730, 4
          %s744 = int_to_ptr.vmem [resolvable:$true] %s743
          %s745 = sshll.u32 %s742, 4
          %s746 = int_to_ptr.hbm [resolvable:$true] %s745
          %751 = dma.vmem_to_hbm [thread:$0]  %s744, 1024, %s746, %s727, 128, 128, 8
        $region60: #{tpu_custom_call.1} parent=39 // pred_fallthru
          _
      $region40: #{tpu_custom_call.1} parent=5 // pred_fallthru
        _
      %p752 = scmp.le.s32.totalorder 2, %s21
      // Predicated region
      $region61: #{tpu_custom_call.1} parent=5 // pred_check
        %p753 = pneg %p752
      $region62: #{tpu_custom_call.1} parent=5 // pred_check_branch
        %755 = sbr.rel (%p753) target = $region64
      $region63: #{tpu_custom_call.1} parent=5 // pred_region
        %s756 = ssub.s32 %s21, 2
        // Predicated region
        $region65: #{tpu_custom_call.1} parent=63 // pred_check
          %p757 = pneg %p231
        $region66: #{tpu_custom_call.1} parent=63 // pred_check_branch
          %759 = sbr.rel (%p757) target = $region68
        $region67: #{tpu_custom_call.1} parent=63 // pred_region
          %s760 = sand.u32 %s216, 1
          %s761 = scalar_lea.sflag [#allocation4], %s760
          %s762 = sand.u32 %s216, 1
          %s763 = smul.addr %s762, 64
          %s764 = scalar_lea.vmem [#allocation10], %s763
          %766 = dma.done %s761, 1024
        $region68: #{tpu_custom_call.1} parent=63 // pred_fallthru
          _
      $region64: #{tpu_custom_call.1} parent=5 // pred_fallthru
        _
    $region6: #{tpu_custom_call.1} parent=1 // loop_footer
      %s25 = sadd.s32 1, %s21
    $region7: #{tpu_custom_call.1} parent=1 // loop_footer_branch
      %20 = sbr.rel target = $region3
    $region8: #{tpu_custom_call.1} parent=1 // loop_exit
      _
    %767 = vsyncpa [#allocation3], 1
    %s768 = scalar_lea.sflag [#allocation3], 1
    %769 = vsyncpa %s768, 1
    %770 = vsyncpa [#allocation6], 1
    %s771 = scalar_lea.sflag [#allocation6], 1
    %772 = vsyncpa %s771, 1
    %773 = vsyncpa [#allocation9], 1
    %774 = vsyncpa [#allocation4], 1
    %s775 = scalar_lea.sflag [#allocation4], 1
    %776 = vsyncpa %s775, 1

</llo_original>
